<compile_context>
chip_gen: v7x
topology: tpu7x:2x2x1
jax: 0.10.0
libtpu: 0.0.40
codegen_flags: <defaults>
</compile_context>

<pallas_src>
import functools

import jax
import jax.numpy as jnp
from jax.experimental import pallas as pl
from jax.experimental.pallas import tpu as pltpu


# ---------------------------------------------------------------------------
# Fused Pallas kernel: entire forward pass in one call
# ---------------------------------------------------------------------------
def _dense_fused_kernel(*refs, acts, n_layers, batch_real):
    """refs = (x_ref, w0, b0, w1, b1, ..., w_{L-1}, b_{L-1}, o_ref).

    Computes act_i(x @ W_i + b_i) for the hidden layers, the final Linear,
    then softmax over dim=0 (batch axis), all VMEM-resident.
    `batch_real` masks zero-padded batch rows out of the dim-0 softmax.
    """
    x_ref = refs[0]
    o_ref = refs[-1]
    wb = refs[1:-1]

    x = x_ref[...]  # f32, padded [Bp, F0p]

    # ---- hidden layers: fused Linear + activation -------------------------
    for i in range(n_layers - 1):
        w = wb[2 * i][...]
        b = wb[2 * i + 1][...]
        # MXU matmul; operands may be bf16 (v6e/v7x), accumulation is f32.
        y = jnp.dot(x.astype(w.dtype), w, preferred_element_type=jnp.float32)
        y = y + b.astype(jnp.float32)
        act = acts[i]
        if act == "ReLU":
            y = jnp.maximum(y, 0.0)
        elif act == "Sigmoid":
            y = jax.nn.sigmoid(y)          # EUP, kept in f32 (v5e-safe)
        elif act == "Tanh":
            y = jnp.tanh(y)                # EUP, kept in f32 (v5e-safe)
        else:
            raise ValueError("Unsupported activation function in list!")
        x = y

    # ---- output layer ------------------------------------------------------
    w = wb[-2][...]
    b = wb[-1][...]
    logits = jnp.dot(x.astype(w.dtype), w, preferred_element_type=jnp.float32)
    logits = logits + b.astype(jnp.float32)

    # ---- softmax over dim=0 (batch axis), exactly as the torch module ------
    # Mask padded batch rows so they do not contribute to max/sum.
    row_ids = jax.lax.broadcasted_iota(jnp.int32, logits.shape, 0)
    logits = jnp.where(row_ids < batch_real, logits, -jnp.inf)
    m = jnp.max(logits, axis=0, keepdims=True)      # cross-sublane reduce (XLU)
    e = jnp.exp(logits - m)
    s = jnp.sum(e, axis=0, keepdims=True)
    o_ref[...] = (e / s).astype(o_ref.dtype)
    # TODO(synk): if the batch ever needs tiling across a grid, the dim-0
    # softmax requires a cross-tile two-pass max/sum (single block assumed here).


# ---------------------------------------------------------------------------
# Wrapper: padding to lane/sublane-friendly shapes + single pallas_call
# ---------------------------------------------------------------------------
def _round_up(n, m):
    return ((n + m - 1) // m) * m


def _pad2d(a, rows, cols):
    return jnp.pad(a, ((0, rows - a.shape[0]), (0, cols - a.shape[1])))


def dense_forward(x, params, activations, *, use_bf16_matmul=False):
    """Pallas implementation of DENSE.forward (single fused kernel)."""
    x = jnp.asarray(x, jnp.float32)
    B, in_features = x.shape
    n_layers = len(params)
    out_features = params[-1][0].shape[1]

    # Padded (lane-dense) dimensions.
    Bp = _round_up(B, 8)                       # f32 sublane multiple
    dims = [in_features] + [w.shape[1] for w, _ in params]
    dims_p = [_round_up(d, 128) for d in dims] # 128-lane multiples

    # Pad input and parameters with zeros (mathematically inert: padded input
    # columns meet zero weight rows; padded output columns get zero logits and
    # are sliced off; padded batch rows are masked inside the kernel).
    x_p = _pad2d(x, Bp, dims_p[0])

    w_dtype = jnp.bfloat16 if use_bf16_matmul else jnp.float32
    flat_inputs = [x_p]
    for li, (w, b) in enumerate(params):
        w_p = _pad2d(jnp.asarray(w, jnp.float32), dims_p[li], dims_p[li + 1])
        b_p = _pad2d(jnp.asarray(b, jnp.float32), 1, dims_p[li + 1])
        flat_inputs.append(w_p.astype(w_dtype))   # cast once, halves weight DMA
        flat_inputs.append(b_p)                   # bias stays f32 (post-acc add)

    out_p = dims_p[-1]

    # Advisory cost estimate so XLA can overlap surrounding work.
    flops = 2 * Bp * sum(dims_p[i] * dims_p[i + 1] for i in range(n_layers))
    transcendentals = Bp * out_p  # softmax exp
    for i, act in enumerate(activations):
        if act in ("Sigmoid", "Tanh"):
            transcendentals += Bp * dims_p[i + 1]
    itemsize = 2 if use_bf16_matmul else 4
    bytes_accessed = (
        4 * Bp * dims_p[0]
        + sum(itemsize * dims_p[i] * dims_p[i + 1] + 4 * dims_p[i + 1]
              for i in range(n_layers))
        + 4 * Bp * out_p
    )

    vmem = pl.BlockSpec(memory_space=pltpu.MemorySpace.VMEM)
    kernel = functools.partial(
        _dense_fused_kernel,
        acts=tuple(activations),
        n_layers=n_layers,
        batch_real=B,
    )
    out_padded = pl.pallas_call(
        kernel,
        out_shape=jax.ShapeDtypeStruct((Bp, out_p), jnp.float32),
        in_specs=[vmem] * len(flat_inputs),
        out_specs=vmem,
        cost_estimate=pl.CostEstimate(
            flops=int(flops),
            transcendentals=int(transcendentals),
            bytes_accessed=int(bytes_accessed),
        ),
    )(*flat_inputs)

    return out_padded[:B, :out_features]


# ---------------------------------------------------------------------------
# Parameter init + pure-JAX reference
# ---------------------------------------------------------------------------
def init_dense_params(key, input_size, output_size, hidden_sizes):
    """Deterministic nn.Linear-style init: U(-1/sqrt(fan_in), 1/sqrt(fan_in))."""
    sizes = [input_size] + list(hidden_sizes) + [output_size]
    params = []
    for fan_in, fan_out in zip(sizes[:-1], sizes[1:]):
        key, kw, kb = jax.random.split(key, 3)
        bound = 1.0 / jnp.sqrt(jnp.float32(fan_in))
        w = jax.random.uniform(kw, (fan_in, fan_out), jnp.float32, -bound, bound)
        b = jax.random.uniform(kb, (1, fan_out), jnp.float32, -bound, bound)
        params.append((w, b))
    return params


def dense_forward_ref(x, params, activations):
    """Pure-JAX f32 reference (matches the torch module)."""
    x = x.astype(jnp.float32)
    for (w, b), act in zip(params[:-1], activations):
        x = x @ w + b
        if act == "ReLU":
            x = jnp.maximum(x, 0.0)
        elif act == "Sigmoid":
            x = jax.nn.sigmoid(x)
        elif act == "Tanh":
            x = jnp.tanh(x)
    w, b = params[-1]
    x = x @ w + b
    return jax.nn.softmax(x, axis=0)   # dim=0, same as torch code


# ---------------------------------------------------------------------------
if __name__ == "__main__":
    # Small shapes consistent with the module's forward
    batch = 8
    input_size = 32
    hidden_sizes = [64, 32]
    activations = ["ReLU", "Tanh"]
    possible_labels = [str(i) for i in range(10)]
    output_size = len(possible_labels)

    key = jax.random.PRNGKey(0)
    key, kx = jax.random.split(key)
    x = jax.random.normal(kx, (batch, input_size), jnp.float32)
    params = init_dense_params(key, input_size, output_size, hidden_sizes)

    ref = dense_forward_ref(x, params, activations)

    # --- f32 operands (exact torch semantics) ------------------------------
    out = dense_forward(x, params, activations, use_bf16_matmul=False)
    out = jax.block_until_ready(out)
    assert out.shape == (batch, output_size)
    assert jnp.allclose(out, ref, atol=1e-5, rtol=1e-5), "f32 mismatch vs reference"
    # softmax over dim=0 => columns sum to 1
    assert jnp.allclose(jnp.sum(out, axis=0), jnp.ones(output_size), atol=1e-5)

    # --- bf16 matmul operands (v6e/v7x-preferred path), f32 accumulation ----
    out_bf16 = dense_forward(x, params, activations, use_bf16_matmul=True)
    out_bf16 = jax.block_until_ready(out_bf16)
    assert out_bf16.shape == (batch, output_size)
    assert jnp.allclose(out_bf16, ref, atol=5e-2, rtol=5e-2), "bf16 mismatch vs reference"
    assert jnp.allclose(jnp.sum(out_bf16, axis=0), jnp.ones(output_size), atol=1e-4)

    print("KERNEL_OK")
</pallas_src>

<mosaic_0001>
module attributes {stable_mosaic.version = 11 : i64} {
  func.func @_dense_fused_kernel(%arg0: memref<8x128xf32, #tpu.memory_space<vmem>>, %arg1: memref<128x128xf32, #tpu.memory_space<vmem>>, %arg2: memref<1x128xf32, #tpu.memory_space<vmem>>, %arg3: memref<128x128xf32, #tpu.memory_space<vmem>>, %arg4: memref<1x128xf32, #tpu.memory_space<vmem>>, %arg5: memref<128x128xf32, #tpu.memory_space<vmem>>, %arg6: memref<1x128xf32, #tpu.memory_space<vmem>>, %arg7: memref<8x128xf32, #tpu.memory_space<vmem>>) attributes {dimension_semantics = [], scalar_prefetch = 0 : i64, scratch_operands = 0 : i64, tpu.core_type = #tpu.core_type<tc>} {
    %c0 = arith.constant 0 : index
    %c0_0 = arith.constant 0 : index
    %0 = vector.load %arg0[%c0, %c0_0] : memref<8x128xf32, #tpu.memory_space<vmem>>, vector<8x128xf32>
    %c0_1 = arith.constant 0 : index
    %c0_2 = arith.constant 0 : index
    %1 = vector.load %arg1[%c0_1, %c0_2] : memref<128x128xf32, #tpu.memory_space<vmem>>, vector<128x128xf32>
    %c0_3 = arith.constant 0 : index
    %c0_4 = arith.constant 0 : index
    %2 = vector.load %arg2[%c0_3, %c0_4] : memref<1x128xf32, #tpu.memory_space<vmem>>, vector<1x128xf32>
    %cst = arith.constant dense<0.000000e+00> : vector<8x128xf32>
    %3 = tpu.matmul %0, %1, %cst {dimension_numbers = #tpu.dot_dimension_numbers<[1], [0], [0], [1], [0, 0, 1, 1], [], []>} : vector<8x128xf32>, vector<128x128xf32>, vector<8x128xf32> -> vector<8x128xf32>
    %4 = vector.broadcast %2 : vector<1x128xf32> to vector<8x128xf32>
    %5 = arith.addf %3, %4 : vector<8x128xf32>
    %cst_5 = arith.constant 0.000000e+00 : f32
    %6 = vector.broadcast %cst_5 : f32 to vector<8x128xf32>
    %7 = arith.maximumf %5, %6 : vector<8x128xf32>
    %c0_6 = arith.constant 0 : index
    %c0_7 = arith.constant 0 : index
    %8 = vector.load %arg3[%c0_6, %c0_7] : memref<128x128xf32, #tpu.memory_space<vmem>>, vector<128x128xf32>
    %c0_8 = arith.constant 0 : index
    %c0_9 = arith.constant 0 : index
    %9 = vector.load %arg4[%c0_8, %c0_9] : memref<1x128xf32, #tpu.memory_space<vmem>>, vector<1x128xf32>
    %cst_10 = arith.constant dense<0.000000e+00> : vector<8x128xf32>
    %10 = tpu.matmul %7, %8, %cst_10 {dimension_numbers = #tpu.dot_dimension_numbers<[1], [0], [0], [1], [0, 0, 1, 1], [], []>} : vector<8x128xf32>, vector<128x128xf32>, vector<8x128xf32> -> vector<8x128xf32>
    %11 = vector.broadcast %9 : vector<1x128xf32> to vector<8x128xf32>
    %12 = arith.addf %10, %11 : vector<8x128xf32>
    %13 = math.tanh %12 : vector<8x128xf32>
    %c0_11 = arith.constant 0 : index
    %c0_12 = arith.constant 0 : index
    %14 = vector.load %arg5[%c0_11, %c0_12] : memref<128x128xf32, #tpu.memory_space<vmem>>, vector<128x128xf32>
    %c0_13 = arith.constant 0 : index
    %c0_14 = arith.constant 0 : index
    %15 = vector.load %arg6[%c0_13, %c0_14] : memref<1x128xf32, #tpu.memory_space<vmem>>, vector<1x128xf32>
    %cst_15 = arith.constant dense<0.000000e+00> : vector<8x128xf32>
    %16 = tpu.matmul %13, %14, %cst_15 {dimension_numbers = #tpu.dot_dimension_numbers<[1], [0], [0], [1], [0, 0, 1, 1], [], []>} : vector<8x128xf32>, vector<128x128xf32>, vector<8x128xf32> -> vector<8x128xf32>
    %17 = vector.broadcast %15 : vector<1x128xf32> to vector<8x128xf32>
    %18 = arith.addf %16, %17 : vector<8x128xf32>
    %19 = tpu.iota {dimensions = array<i32: 0>} : vector<8x128xi32>
    %c8_i32 = arith.constant 8 : i32
    %20 = vector.broadcast %c8_i32 : i32 to vector<8x128xi32>
    %21 = arith.cmpi slt, %19, %20 : vector<8x128xi32>
    %cst_16 = arith.constant 0xFF800000 : f32
    %22 = vector.broadcast %cst_16 : f32 to vector<8x128xf32>
    %23 = arith.select %21, %18, %22 : vector<8x128xi1>, vector<8x128xf32>
    %cst_17 = arith.constant dense<0xFF800000> : vector<128xf32>
    %24 = vector.multi_reduction <maximumf>, %23, %cst_17 [0] : vector<8x128xf32> to vector<128xf32>
    %25 = vector.shape_cast %24 : vector<128xf32> to vector<1x128xf32>
    %26 = vector.broadcast %25 : vector<1x128xf32> to vector<8x128xf32>
    %27 = arith.subf %23, %26 : vector<8x128xf32>
    %28 = math.exp %27 : vector<8x128xf32>
    %cst_18 = arith.constant dense<0.000000e+00> : vector<128xf32>
    %29 = vector.multi_reduction <add>, %28, %cst_18 [0] : vector<8x128xf32> to vector<128xf32>
    %30 = vector.shape_cast %29 : vector<128xf32> to vector<1x128xf32>
    %31 = vector.broadcast %30 : vector<1x128xf32> to vector<8x128xf32>
    %32 = arith.divf %28, %31 : vector<8x128xf32>
    %c0_19 = arith.constant 0 : index
    %c0_20 = arith.constant 0 : index
    %33 = vector.load %arg7[%c0_19, %c0_20] : memref<8x128xf32, #tpu.memory_space<vmem>>, vector<8x128xf32>
    tpu.vector_store %arg7[%c0_19, %c0_20], %32 {strides = array<i32>} : memref<8x128xf32, #tpu.memory_space<vmem>>, vector<8x128xf32>,
    return
  }
}

</mosaic_0001>

<llo_original>
// kernel: tpu_custom_call.1
$region0: #{tpu_custom_call.1}
  #allocation0 [shape = 'u32[]', space=smem, size = 0x4, offset = 0x4, fixed_abs, tag = 'smem constant byte address 0x4 - core index']
  #allocation1 [shape = 'u32[144,128]{1,0:T(1,128)}', space=vmem, size = 0x12000, scoped, tag = 'internal scratch']
  %s0 = inlined_call_operand.hbm [shape: f32[8,128], index: 0, kind: input, shape index: {}]
  %s1 = inlined_call_operand.hbm [shape: f32[128,128], index: 1, kind: input, shape index: {}]
  %s2 = inlined_call_operand.vmem [shape: f32[1,128], index: 2, kind: input, shape index: {}]
  %s3 = inlined_call_operand.hbm [shape: f32[128,128], index: 3, kind: input, shape index: {}]
  %s4 = inlined_call_operand.vmem [shape: f32[1,128], index: 4, kind: input, shape index: {}]
  %s5 = inlined_call_operand.hbm [shape: f32[128,128], index: 5, kind: input, shape index: {}]
  %s6 = inlined_call_operand.vmem [shape: f32[1,128], index: 6, kind: input, shape index: {}]
  %s7 = inlined_call_operand.hbm [shape: f32[8,128], index: 7, kind: output, shape index: {}]
  %s8 = sld [smem:[#allocation0]]
  $region54: #{tpu_custom_call.1} parent=0
    _
  %s10 = ssub.s32 1, %s8
  %s11 = scalar_select 0, %s10, %s8
  $region1: #{tpu_custom_call.1} parent=0
    #allocation2 [shape = 'u8[4096]{0}', space=vmem, size = 0x1000, scoped, tag = 'input window, operand 0, single buffered']
    #allocation3 [shape = 's32[1]{0}', space=sflag, size = 0x4, scoped, tag = 'scoped memory for tpu_custom_call.1']
    #allocation4 [shape = 's32[1]{0}', space=sflag, size = 0x4, scoped, tag = 'scoped memory for tpu_custom_call.1']
    #allocation5 [shape = 'u8[65536]{0}', space=vmem, size = 0x10000, scoped, tag = 'input window, operand 1, single buffered']
    #allocation6 [shape = 's32[1]{0}', space=sflag, size = 0x4, scoped, tag = 'scoped memory for tpu_custom_call.1']
    #allocation7 [shape = 'u8[65536]{0}', space=vmem, size = 0x10000, scoped, tag = 'input window, operand 3, single buffered']
    #allocation8 [shape = 'u8[65536]{0}', space=vmem, size = 0x10000, scoped, tag = 'input window, operand 5, single buffered']
    #allocation9 [shape = 's32[1]{0}', space=sflag, size = 0x4, scoped, tag = 'scoped memory for tpu_custom_call.1']
    #allocation10 [shape = 'u8[4096]{0}', space=vmem, size = 0x1000, scoped, tag = 'output window, operand 0, single buffered']
    %12 = vsyncpa [#allocation3], 0
    %13 = vsyncpa [#allocation6], 0
    %14 = vsyncpa [#allocation9], 0
    %15 = vsyncpa [#allocation4], 0
    // Predicated region
    $region2: #{tpu_custom_call.1} parent=1 // pred_check
      _
    $region3: #{tpu_custom_call.1} parent=1 // pred_check_branch
      %17 = sbr.rel (0) target = $region5
    $region4: #{tpu_custom_call.1} parent=1 // pred_region
      %s19 = ssub.s32 128, 128
      %20 = vsyncadd [#allocation3], %s19
      %s22 = sshll.u32 [#allocation2], 4
      %s23 = int_to_ptr.vmem [resolvable:$true] %s22
      %25 = dma.hbm_to_vmem [thread:$0]  %s0, 128, %s23, [#allocation3]
    $region5: #{tpu_custom_call.1} parent=1 // pred_fallthru
      _
    // Predicated region
    $region6: #{tpu_custom_call.1} parent=1 // pred_check
      _
    $region7: #{tpu_custom_call.1} parent=1 // pred_check_branch
      %27 = sbr.rel (0) target = $region9
    $region8: #{tpu_custom_call.1} parent=1 // pred_region
      %s29 = ssub.s32 2048, 2048
      %30 = vsyncadd [#allocation6], %s29
      %s31 = sshll.u32 [#allocation5], 4
      %s32 = int_to_ptr.vmem [resolvable:$true] %s31
      %37 = dma.hbm_to_vmem [thread:$0]  %s1, 2048, %s32, [#allocation6], 128, 128, 8
    $region9: #{tpu_custom_call.1} parent=1 // pred_fallthru
      _
    // Predicated region
    $region10: #{tpu_custom_call.1} parent=1 // pred_check
      _
    $region11: #{tpu_custom_call.1} parent=1 // pred_check_branch
      %39 = sbr.rel (0) target = $region13
    $region12: #{tpu_custom_call.1} parent=1 // pred_region
      _
    $region13: #{tpu_custom_call.1} parent=1 // pred_fallthru
      _
    // Predicated region
    $region14: #{tpu_custom_call.1} parent=1 // pred_check
      _
    $region15: #{tpu_custom_call.1} parent=1 // pred_check_branch
      %41 = sbr.rel (0) target = $region17
    $region16: #{tpu_custom_call.1} parent=1 // pred_region
      %s43 = ssub.s32 2048, 2048
      %44 = vsyncadd [#allocation6], %s43
      %s45 = sshll.u32 [#allocation7], 4
      %s46 = int_to_ptr.vmem [resolvable:$true] %s45
      %51 = dma.hbm_to_vmem [thread:$0]  %s3, 2048, %s46, [#allocation6], 128, 128, 8
    $region17: #{tpu_custom_call.1} parent=1 // pred_fallthru
      _
    // Predicated region
    $region18: #{tpu_custom_call.1} parent=1 // pred_check
      _
    $region19: #{tpu_custom_call.1} parent=1 // pred_check_branch
      %53 = sbr.rel (0) target = $region21
    $region20: #{tpu_custom_call.1} parent=1 // pred_region
      _
    $region21: #{tpu_custom_call.1} parent=1 // pred_fallthru
      _
    // Predicated region
    $region22: #{tpu_custom_call.1} parent=1 // pred_check
      _
    $region23: #{tpu_custom_call.1} parent=1 // pred_check_branch
      %55 = sbr.rel (0) target = $region25
    $region24: #{tpu_custom_call.1} parent=1 // pred_region
      %s57 = ssub.s32 2048, 2048
      %58 = vsyncadd [#allocation9], %s57
      %s59 = sshll.u32 [#allocation8], 4
      %s60 = int_to_ptr.vmem [resolvable:$true] %s59
      %65 = dma.hbm_to_vmem [thread:$0]  %s5, 2048, %s60, [#allocation9], 128, 128, 8
    $region25: #{tpu_custom_call.1} parent=1 // pred_fallthru
      _
    // Predicated region
    $region26: #{tpu_custom_call.1} parent=1 // pred_check
      _
    $region27: #{tpu_custom_call.1} parent=1 // pred_check_branch
      %67 = sbr.rel (0) target = $region29
    $region28: #{tpu_custom_call.1} parent=1 // pred_region
      _
    $region29: #{tpu_custom_call.1} parent=1 // pred_fallthru
      _
    // Predicated region
    $region30: #{tpu_custom_call.1} parent=1 // pred_check
      _
    $region31: #{tpu_custom_call.1} parent=1 // pred_check_branch
      %69 = sbr.rel (0) target = $region33
    $region32: #{tpu_custom_call.1} parent=1 // pred_region
      %70 = dma.done [#allocation3], 128
    $region33: #{tpu_custom_call.1} parent=1 // pred_fallthru
      _
    // Predicated region
    $region34: #{tpu_custom_call.1} parent=1 // pred_check
      _
    $region35: #{tpu_custom_call.1} parent=1 // pred_check_branch
      %72 = sbr.rel (0) target = $region37
    $region36: #{tpu_custom_call.1} parent=1 // pred_region
      %73 = dma.done [#allocation6], 2048
    $region37: #{tpu_custom_call.1} parent=1 // pred_fallthru
      _
    // Predicated region
    $region38: #{tpu_custom_call.1} parent=1 // pred_check
      _
    $region39: #{tpu_custom_call.1} parent=1 // pred_check_branch
      %75 = sbr.rel (0) target = $region41
    $region40: #{tpu_custom_call.1} parent=1 // pred_region
      %76 = dma.done [#allocation6], 2048
    $region41: #{tpu_custom_call.1} parent=1 // pred_fallthru
      _
    // Predicated region
    $region42: #{tpu_custom_call.1} parent=1 // pred_check
      _
    $region43: #{tpu_custom_call.1} parent=1 // pred_check_branch
      %78 = sbr.rel (0) target = $region45
    $region44: #{tpu_custom_call.1} parent=1 // pred_region
      %79 = dma.done [#allocation9], 2048
    $region45: #{tpu_custom_call.1} parent=1 // pred_fallthru
      _
    %v80 = vld [vmem:[#allocation2] sm:$0xff]
    %v81 = vld [vmem:[#allocation5] sm:$0xff]
    %v82 = vld [vmem:[#allocation5 + $0x8] sm:$0xff]
    %v83 = vld [vmem:[#allocation5 + $0x10] sm:$0xff]
    %v84 = vld [vmem:[#allocation5 + $0x18] sm:$0xff]
    %v85 = vld [vmem:[#allocation5 + $0x20] sm:$0xff]
    %v86 = vld [vmem:[#allocation5 + $0x28] sm:$0xff]
    %v87 = vld [vmem:[#allocation5 + $0x30] sm:$0xff]
    %v88 = vld [vmem:[#allocation5 + $0x38] sm:$0xff]
    %v89 = vld [vmem:[#allocation5 + $0x40] sm:$0xff]
    %v90 = vld [vmem:[#allocation5 + $0x48] sm:$0xff]
    %v91 = vld [vmem:[#allocation5 + $0x50] sm:$0xff]
    %v92 = vld [vmem:[#allocation5 + $0x58] sm:$0xff]
    %v93 = vld [vmem:[#allocation5 + $0x60] sm:$0xff]
    %v94 = vld [vmem:[#allocation5 + $0x68] sm:$0xff]
    %v95 = vld [vmem:[#allocation5 + $0x70] sm:$0xff]
    %v96 = vld [vmem:[#allocation5 + $0x78] sm:$0xff]
    %v97 = vld [vmem:[%s2] sm:$0x1]
    %v99 = vlaneseq
    %v100 = vshrl.u32 %v99, 7
    %v101 = vsub.s32 0, %v100
    %v102 = vrot.slane %v97, %v101
    %104 = vmatprep.subr.mxu0 0.0
    %105 = vmatpush1.msra.mxu0 %v81
    %106 = vmatprep.subr.mxu0 0.0
    %107 = vmatpush1.msra.mxu0 %v82
    %108 = vmatprep.subr.mxu0 0.0
    %109 = vmatpush1.msra.mxu0 %v83
    %110 = vmatprep.subr.mxu0 0.0
    %111 = vmatpush1.msra.mxu0 %v84
    %112 = vmatprep.subr.mxu0 0.0
    %113 = vmatpush1.msra.mxu0 %v85
    %114 = vmatprep.subr.mxu0 0.0
    %115 = vmatpush1.msra.mxu0 %v86
    %116 = vmatprep.subr.mxu0 0.0
    %117 = vmatpush1.msra.mxu0 %v87
    %118 = vmatprep.subr.mxu0 0.0
    %119 = vmatpush1.msra.mxu0 %v88
    %120 = vmatprep.subr.mxu0 0.0
    %121 = vmatpush1.msra.mxu0 %v89
    %122 = vmatprep.subr.mxu0 0.0
    %123 = vmatpush1.msra.mxu0 %v90
    %124 = vmatprep.subr.mxu0 0.0
    %125 = vmatpush1.msra.mxu0 %v91
    %126 = vmatprep.subr.mxu0 0.0
    %127 = vmatpush1.msra.mxu0 %v92
    %128 = vmatprep.subr.mxu0 0.0
    %129 = vmatpush1.msra.mxu0 %v93
    %130 = vmatprep.subr.mxu0 0.0
    %131 = vmatpush1.msra.mxu0 %v94
    %132 = vmatprep.subr.mxu0 0.0
    %133 = vmatpush1.msra.mxu0 %v95
    %134 = vmatprep.subr.mxu0 0.0
    %135 = vmatpush1.msra.mxu0 %v96
    %136 = vmatprep.subr.mxu0 0.0
    %137 = vmatpush1.msra.mxu0 0.0
    %138 = vmatprep.subr.mxu0 0.0
    %139 = vmatpush1.msra.mxu0 0.0
    %140 = vmatprep.subr.mxu0 0.0
    %141 = vmatpush1.msra.mxu0 0.0
    %142 = vmatprep.subr.mxu0 0.0
    %143 = vmatpush1.msra.mxu0 0.0
    %144 = vmatprep.subr.mxu0 0.0
    %145 = vmatpush1.msra.mxu0 0.0
    %146 = vmatprep.subr.mxu0 0.0
    %147 = vmatpush1.msra.mxu0 0.0
    %148 = vmatprep.subr.mxu0 0.0
    %149 = vmatpush1.msra.mxu0 0.0
    %150 = vmatprep.subr.mxu0 0.0
    %151 = vmatpush1.msra.mxu0 0.0
    %152 = vmatprep.subr.mxu0 0.0
    %153 = vmatpush1.msra.mxu0 0.0
    %154 = vmatprep.subr.mxu0 0.0
    %155 = vmatpush1.msra.mxu0 0.0
    %156 = vmatprep.subr.mxu0 0.0
    %157 = vmatpush1.msra.mxu0 0.0
    %158 = vmatprep.subr.mxu0 0.0
    %159 = vmatpush1.msra.mxu0 0.0
    %160 = vmatprep.subr.mxu0 0.0
    %161 = vmatpush1.msra.mxu0 0.0
    %162 = vmatprep.subr.mxu0 0.0
    %163 = vmatpush1.msra.mxu0 0.0
    %164 = vmatprep.subr.mxu0 0.0
    %165 = vmatpush1.msra.mxu0 0.0
    %166 = vmatprep.subr.mxu0 0.0
    %167 = vmatpush1.msra.mxu0 0.0
    %168 = vmatprep.mubr.f32.mxu0 0.0
    %169 = vmatmul.mubr.f32.gmra.mrb[0].mxu0 %v80
    %v170 = vpop.f32.mrb[0].mxu0
    %v171 = vadd.f32 %v102, %v170
    %v172 = vpop.f32.mrb[0].mxu0
    %173 = vdwg.mxu0
    %v174 = vmax.f32 %v171, 0.0
    %v175 = vld [vmem:[#allocation7] sm:$0xff]
    %v176 = vld [vmem:[#allocation7 + $0x8] sm:$0xff]
    %v177 = vld [vmem:[#allocation7 + $0x10] sm:$0xff]
    %v178 = vld [vmem:[#allocation7 + $0x18] sm:$0xff]
    %v179 = vld [vmem:[#allocation7 + $0x20] sm:$0xff]
    %v180 = vld [vmem:[#allocation7 + $0x28] sm:$0xff]
    %v181 = vld [vmem:[#allocation7 + $0x30] sm:$0xff]
    %v182 = vld [vmem:[#allocation7 + $0x38] sm:$0xff]
    %v183 = vld [vmem:[#allocation7 + $0x40] sm:$0xff]
    %v184 = vld [vmem:[#allocation7 + $0x48] sm:$0xff]
    %v185 = vld [vmem:[#allocation7 + $0x50] sm:$0xff]
    %v186 = vld [vmem:[#allocation7 + $0x58] sm:$0xff]
    %v187 = vld [vmem:[#allocation7 + $0x60] sm:$0xff]
    %v188 = vld [vmem:[#allocation7 + $0x68] sm:$0xff]
    %v189 = vld [vmem:[#allocation7 + $0x70] sm:$0xff]
    %v190 = vld [vmem:[#allocation7 + $0x78] sm:$0xff]
    %v191 = vld [vmem:[%s4] sm:$0x1]
    %v193 = vlaneseq
    %v194 = vshrl.u32 %v193, 7
    %v195 = vsub.s32 0, %v194
    %v196 = vrot.slane %v191, %v195
    %198 = vmatprep.subr.mxu0 0.0
    %199 = vmatpush1.msra.mxu0 %v175
    %200 = vmatprep.subr.mxu0 0.0
    %201 = vmatpush1.msra.mxu0 %v176
    %202 = vmatprep.subr.mxu0 0.0
    %203 = vmatpush1.msra.mxu0 %v177
    %204 = vmatprep.subr.mxu0 0.0
    %205 = vmatpush1.msra.mxu0 %v178
    %206 = vmatprep.subr.mxu0 0.0
    %207 = vmatpush1.msra.mxu0 %v179
    %208 = vmatprep.subr.mxu0 0.0
    %209 = vmatpush1.msra.mxu0 %v180
    %210 = vmatprep.subr.mxu0 0.0
    %211 = vmatpush1.msra.mxu0 %v181
    %212 = vmatprep.subr.mxu0 0.0
    %213 = vmatpush1.msra.mxu0 %v182
    %214 = vmatprep.subr.mxu0 0.0
    %215 = vmatpush1.msra.mxu0 %v183
    %216 = vmatprep.subr.mxu0 0.0
    %217 = vmatpush1.msra.mxu0 %v184
    %218 = vmatprep.subr.mxu0 0.0
    %219 = vmatpush1.msra.mxu0 %v185
    %220 = vmatprep.subr.mxu0 0.0
    %221 = vmatpush1.msra.mxu0 %v186
    %222 = vmatprep.subr.mxu0 0.0
    %223 = vmatpush1.msra.mxu0 %v187
    %224 = vmatprep.subr.mxu0 0.0
    %225 = vmatpush1.msra.mxu0 %v188
    %226 = vmatprep.subr.mxu0 0.0
    %227 = vmatpush1.msra.mxu0 %v189
    %228 = vmatprep.subr.mxu0 0.0
    %229 = vmatpush1.msra.mxu0 %v190
    %230 = vmatprep.subr.mxu0 0.0
    %231 = vmatpush1.msra.mxu0 0.0
    %232 = vmatprep.subr.mxu0 0.0
    %233 = vmatpush1.msra.mxu0 0.0
    %234 = vmatprep.subr.mxu0 0.0
    %235 = vmatpush1.msra.mxu0 0.0
    %236 = vmatprep.subr.mxu0 0.0
    %237 = vmatpush1.msra.mxu0 0.0
    %238 = vmatprep.subr.mxu0 0.0
    %239 = vmatpush1.msra.mxu0 0.0
    %240 = vmatprep.subr.mxu0 0.0
    %241 = vmatpush1.msra.mxu0 0.0
    %242 = vmatprep.subr.mxu0 0.0
    %243 = vmatpush1.msra.mxu0 0.0
    %244 = vmatprep.subr.mxu0 0.0
    %245 = vmatpush1.msra.mxu0 0.0
    %246 = vmatprep.subr.mxu0 0.0
    %247 = vmatpush1.msra.mxu0 0.0
    %248 = vmatprep.subr.mxu0 0.0
    %249 = vmatpush1.msra.mxu0 0.0
    %250 = vmatprep.subr.mxu0 0.0
    %251 = vmatpush1.msra.mxu0 0.0
    %252 = vmatprep.subr.mxu0 0.0
    %253 = vmatpush1.msra.mxu0 0.0
    %254 = vmatprep.subr.mxu0 0.0
    %255 = vmatpush1.msra.mxu0 0.0
    %256 = vmatprep.subr.mxu0 0.0
    %257 = vmatpush1.msra.mxu0 0.0
    %258 = vmatprep.subr.mxu0 0.0
    %259 = vmatpush1.msra.mxu0 0.0
    %260 = vmatprep.subr.mxu0 0.0
    %261 = vmatpush1.msra.mxu0 0.0
    %262 = vmatprep.mubr.f32.mxu0 0.0
    %263 = vmatmul.mubr.f32.gmra.mrb[0].mxu0 %v174
    %v264 = vpop.f32.mrb[0].mxu0
    %v265 = vadd.f32 %v196, %v264
    %v266 = vpop.f32.mrb[0].mxu0
    %267 = vdwg.mxu0
    %v268 = vtanh.pop %v265
    %v269 = vld [vmem:[#allocation8] sm:$0xff]
    %v270 = vld [vmem:[#allocation8 + $0x8] sm:$0xff]
    %v271 = vld [vmem:[#allocation8 + $0x10] sm:$0xff]
    %v272 = vld [vmem:[#allocation8 + $0x18] sm:$0xff]
    %v273 = vld [vmem:[#allocation8 + $0x20] sm:$0xff]
    %v274 = vld [vmem:[#allocation8 + $0x28] sm:$0xff]
    %v275 = vld [vmem:[#allocation8 + $0x30] sm:$0xff]
    %v276 = vld [vmem:[#allocation8 + $0x38] sm:$0xff]
    %v277 = vld [vmem:[#allocation8 + $0x40] sm:$0xff]
    %v278 = vld [vmem:[#allocation8 + $0x48] sm:$0xff]
    %v279 = vld [vmem:[#allocation8 + $0x50] sm:$0xff]
    %v280 = vld [vmem:[#allocation8 + $0x58] sm:$0xff]
    %v281 = vld [vmem:[#allocation8 + $0x60] sm:$0xff]
    %v282 = vld [vmem:[#allocation8 + $0x68] sm:$0xff]
    %v283 = vld [vmem:[#allocation8 + $0x70] sm:$0xff]
    %v284 = vld [vmem:[#allocation8 + $0x78] sm:$0xff]
    %v285 = vld [vmem:[%s6] sm:$0x1]
    %v287 = vlaneseq
    %v288 = vshrl.u32 %v287, 7
    %v289 = vsub.s32 0, %v288
    %v290 = vrot.slane %v285, %v289
    %292 = vmatprep.subr.mxu0 0.0
    %293 = vmatpush1.msra.mxu0 %v269
    %294 = vmatprep.subr.mxu0 0.0
    %295 = vmatpush1.msra.mxu0 %v270
    %296 = vmatprep.subr.mxu0 0.0
    %297 = vmatpush1.msra.mxu0 %v271
    %298 = vmatprep.subr.mxu0 0.0
    %299 = vmatpush1.msra.mxu0 %v272
    %300 = vmatprep.subr.mxu0 0.0
    %301 = vmatpush1.msra.mxu0 %v273
    %302 = vmatprep.subr.mxu0 0.0
    %303 = vmatpush1.msra.mxu0 %v274
    %304 = vmatprep.subr.mxu0 0.0
    %305 = vmatpush1.msra.mxu0 %v275
    %306 = vmatprep.subr.mxu0 0.0
    %307 = vmatpush1.msra.mxu0 %v276
    %308 = vmatprep.subr.mxu0 0.0
    %309 = vmatpush1.msra.mxu0 %v277
    %310 = vmatprep.subr.mxu0 0.0
    %311 = vmatpush1.msra.mxu0 %v278
    %312 = vmatprep.subr.mxu0 0.0
    %313 = vmatpush1.msra.mxu0 %v279
    %314 = vmatprep.subr.mxu0 0.0
    %315 = vmatpush1.msra.mxu0 %v280
    %316 = vmatprep.subr.mxu0 0.0
    %317 = vmatpush1.msra.mxu0 %v281
    %318 = vmatprep.subr.mxu0 0.0
    %319 = vmatpush1.msra.mxu0 %v282
    %320 = vmatprep.subr.mxu0 0.0
    %321 = vmatpush1.msra.mxu0 %v283
    %322 = vmatprep.subr.mxu0 0.0
    %323 = vmatpush1.msra.mxu0 %v284
    %324 = vmatprep.subr.mxu0 0.0
    %325 = vmatpush1.msra.mxu0 0.0
    %326 = vmatprep.subr.mxu0 0.0
    %327 = vmatpush1.msra.mxu0 0.0
    %328 = vmatprep.subr.mxu0 0.0
    %329 = vmatpush1.msra.mxu0 0.0
    %330 = vmatprep.subr.mxu0 0.0
    %331 = vmatpush1.msra.mxu0 0.0
    %332 = vmatprep.subr.mxu0 0.0
    %333 = vmatpush1.msra.mxu0 0.0
    %334 = vmatprep.subr.mxu0 0.0
    %335 = vmatpush1.msra.mxu0 0.0
    %336 = vmatprep.subr.mxu0 0.0
    %337 = vmatpush1.msra.mxu0 0.0
    %338 = vmatprep.subr.mxu0 0.0
    %339 = vmatpush1.msra.mxu0 0.0
    %340 = vmatprep.subr.mxu0 0.0
    %341 = vmatpush1.msra.mxu0 0.0
    %342 = vmatprep.subr.mxu0 0.0
    %343 = vmatpush1.msra.mxu0 0.0
    %344 = vmatprep.subr.mxu0 0.0
    %345 = vmatpush1.msra.mxu0 0.0
    %346 = vmatprep.subr.mxu0 0.0
    %347 = vmatpush1.msra.mxu0 0.0
    %348 = vmatprep.subr.mxu0 0.0
    %349 = vmatpush1.msra.mxu0 0.0
    %350 = vmatprep.subr.mxu0 0.0
    %351 = vmatpush1.msra.mxu0 0.0
    %352 = vmatprep.subr.mxu0 0.0
    %353 = vmatpush1.msra.mxu0 0.0
    %354 = vmatprep.subr.mxu0 0.0
    %355 = vmatpush1.msra.mxu0 0.0
    %356 = vmatprep.mubr.f32.mxu0 0.0
    %357 = vmatmul.mubr.f32.gmra.mrb[0].mxu0 %v268
    %v358 = vpop.f32.mrb[0].mxu0
    %v359 = vadd.f32 %v290, %v358
    %v360 = vpop.f32.mrb[0].mxu0
    %361 = vdwg.mxu0
    %v362 = vlaneseq
    %v363 = vshrl.u32 %v362, 7
    %vm364 = vcmp.lt.s32.totalorder %v363, 8
    %v365 = vsel %vm364, %v359, -inf
    %v366 = vrot.slane %v365, 4
    %v367 = vmax.f32 %v365, %v366
    %v368 = vrot.slane %v367, 2
    %v369 = vmax.f32 %v367, %v368
    %v370 = vrot.slane %v369, 1
    %v371 = vmax.f32 %v369, %v370
    %v372 = vsub.f32 %v365, %v371
    %v373 = vmul.f32 %v372, 1.442695
    %v374 = vpow.pop %v373
    %v375 = vrot.slane %v374, 4
    %v376 = vadd.f32 %v374, %v375
    %v377 = vrot.slane %v376, 2
    %v378 = vadd.f32 %v376, %v377
    %v379 = vrot.slane %v378, 1
    %v380 = vadd.f32 %v378, %v379
    %v381 = vrcp.pop %v380
    %v382 = vmul.f32 %v374, %v381
    %383 = vst [vmem:[#allocation10] sm:$0xff] %v382
    // Predicated region
    $region46: #{tpu_custom_call.1} parent=1 // pred_check
      _
    $region47: #{tpu_custom_call.1} parent=1 // pred_check_branch
      %385 = sbr.rel (0) target = $region49
    $region48: #{tpu_custom_call.1} parent=1 // pred_region
      %s387 = ssub.s32 128, 128
      %388 = vsyncadd [#allocation4], %s387
      %s390 = sshll.u32 [#allocation10], 4
      %s391 = int_to_ptr.vmem [resolvable:$true] %s390
      %393 = dma.vmem_to_hbm [thread:$0]  %s391, 128, %s7, [#allocation4]
    $region49: #{tpu_custom_call.1} parent=1 // pred_fallthru
      _
    // Predicated region
    $region50: #{tpu_custom_call.1} parent=1 // pred_check
      _
    $region51: #{tpu_custom_call.1} parent=1 // pred_check_branch
      %395 = sbr.rel (0) target = $region53
    $region52: #{tpu_custom_call.1} parent=1 // pred_region
      %396 = dma.done [#allocation4], 128
    $region53: #{tpu_custom_call.1} parent=1 // pred_fallthru
      _
    %397 = vsyncpa [#allocation3], 1
    %398 = vsyncpa [#allocation6], 1
    %399 = vsyncpa [#allocation9], 1
    %400 = vsyncpa [#allocation4], 1

</llo_original>
